<compile_context>
chip_gen: v7x
topology: tpu7x:2x2x1
jax: 0.10.0
libtpu: 0.0.40
codegen_flags: <defaults>
</compile_context>

<pallas_src>
import jax
import jax.numpy as jnp
from jax.experimental import pallas as pl
from jax.experimental.pallas import tpu as pltpu


# ---------------------------------------------------------------------------
# Pallas kernel: whole ResBlock for one image (grid iterates over batch)
# ---------------------------------------------------------------------------
def resblock_kernel(x_ref, wb1_ref, t1_ref, wb2_ref, t2_ref, o_ref, pad_ref):
    H = x_ref.shape[1]            # rows per image
    WC = x_ref.shape[2]           # lane-dense row width (W * C)
    cdt = pad_ref.dtype           # MXU operand dtype (bf16 fast path, f32 exact path)

    x = x_ref[0]                  # (H, WC) float32, lane-dense

    # Zero the halo rows (interior rows 1..H are always overwritten below).
    # Scratch layout ownership can differ per core under "parallel" grid
    # partitioning, so (re)write the two halo rows every step -- it is cheap.
    zrow = jnp.zeros((1, WC), cdt)
    pad_ref[0:1, :] = zrow
    pad_ref[H + 1:H + 2, :] = zrow

    def conv3x3(wb_ref, t_ref):
        # "Row im2col": three full-lane-width row-shifted views of the padded
        # scratch concatenated along lanes -> a single MXU matmul (M=H, K=3*WC,
        # N=WC) against the banded, BN-folded weights.  fp32 accumulation.
        p = jnp.concatenate(
            [pad_ref[0:H, :], pad_ref[1:H + 1, :], pad_ref[2:H + 2, :]], axis=-1)
        y = jnp.dot(p, wb_ref[...], preferred_element_type=jnp.float32)
        return y + t_ref[...]     # (H, WC) f32; t = BN shift with conv bias folded in

    # ConvLayer #1: conv3x3 (+ folded BN1) -> ReLU
    pad_ref[1:H + 1, :] = x.astype(cdt)
    y = jnp.maximum(conv3x3(wb1_ref, t1_ref), 0.0)

    # ConvLayer #2: conv3x3 (+ folded BN2), no activation; scratch reused
    pad_ref[1:H + 1, :] = y.astype(cdt)
    y = conv3x3(wb2_ref, t2_ref)

    # identity shortcut + final ReLU (lane-dense 128-wide store)
    o_ref[0] = jnp.maximum(x + y, 0.0).astype(o_ref.dtype)


# ---------------------------------------------------------------------------
# Wrapper-side parameter folding (pure JAX, runs once)
# ---------------------------------------------------------------------------
def _fold_conv_bn_banded(w_hwio, bias, gamma, beta, mean, var, W, eps=1e-5):
    """Fold eval-mode BN into the conv and rewrite the 3x3 conv as a banded
    (3*W*Cin, W*Cout) matrix acting on lane-dense (W*C,) rows."""
    _, _, cin, cout = w_hwio.shape
    s = gamma / jnp.sqrt(var + eps)                 # (Cout,)
    t = beta + (bias - mean) * s                    # (Cout,)  conv bias folded in
    w = w_hwio * s[None, None, None, :]             # BN scale folded into weights

    # sel[kw, wi, wo] = 1  iff  input column wi feeds output column wo via tap kw
    # (wi out of range never matches -> zero padding along W is implicit).
    kwi = jnp.arange(3)[:, None, None]
    wi = jnp.arange(W)[None, :, None]
    wo = jnp.arange(W)[None, None, :]
    sel = (wi == wo + kwi - 1).astype(w.dtype)      # (3, W, W)

    # wb[kh, wi, ci, wo, co] = w[kh, wi-wo+1, ci, co] inside the band, else 0
    wb = jnp.einsum("akio,kxy->axiyo", w, sel)      # (3, W, Cin, W, Cout)
    wb = wb.reshape(3 * W * cin, W * cout)
    t_row = jnp.tile(t, W).reshape(1, W * cout)     # shift, broadcast over sublanes
    return wb, t_row


def res_block_forward(x_nchw, params, *, compute_dtype=jnp.bfloat16):
    N, C, H, W = x_nchw.shape
    WC = W * C                                      # 128 here -> lane-dense rows

    # NCHW -> lane-dense (N, H, W*C)
    x_rows = jnp.transpose(x_nchw, (0, 2, 3, 1)).astype(jnp.float32).reshape(N, H, WC)

    wb1, t1 = _fold_conv_bn_banded(params["w1"], params["b1"], params["gamma1"],
                                   params["beta1"], params["mean1"], params["var1"], W)
    wb2, t2 = _fold_conv_bn_banded(params["w2"], params["b2"], params["gamma2"],
                                   params["beta2"], params["mean2"], params["var2"], W)
    wb1 = wb1.astype(compute_dtype)                 # bf16 MXU operands on v6e/v7x
    wb2 = wb2.astype(compute_dtype)

    img_spec = pl.BlockSpec((1, H, WC), lambda n: (n, 0, 0))
    # Constant index_maps -> weights / shifts stay resident in VMEM across the
    # batch grid (no re-DMA per step).
    wgt_spec = pl.BlockSpec((3 * WC, WC), lambda n: (0, 0))
    row_spec = pl.BlockSpec((1, WC), lambda n: (0, 0))

    out_rows = pl.pallas_call(
        resblock_kernel,
        out_shape=jax.ShapeDtypeStruct((N, H, WC), jnp.float32),
        grid_spec=pltpu.PrefetchScalarGridSpec(
            num_scalar_prefetch=0,
            grid=(N,),
            in_specs=[img_spec, wgt_spec, row_spec, wgt_spec, row_spec],
            out_specs=img_spec,
            scratch_shapes=[pltpu.VMEM((H + 2, WC), compute_dtype)],
        ),
        compiler_params=pltpu.CompilerParams(
            dimension_semantics=("parallel",),
            vmem_limit_bytes=32 * 1024 * 1024,
        ),
    )(x_rows, wb1, t1, wb2, t2)

    out = out_rows.reshape(N, H, W, C)
    return jnp.transpose(out, (0, 3, 1, 2))         # back to NCHW


# ---------------------------------------------------------------------------
# Pure-JAX reference for verification
# ---------------------------------------------------------------------------
def res_block_reference(x_nchw, params):
    eps = 1e-5

    def conv(x, w, b):   # x NCHW, w HWIO
        y = jax.lax.conv_general_dilated(
            x, w, window_strides=(1, 1), padding="SAME",
            dimension_numbers=("NCHW", "HWIO", "NCHW"))
        return y + b[None, :, None, None]

    def bn(y, g, b, m, v):
        return (y - m[None, :, None, None]) / jnp.sqrt(v[None, :, None, None] + eps) \
               * g[None, :, None, None] + b[None, :, None, None]

    x = x_nchw.astype(jnp.float32)
    y = conv(x, params["w1"], params["b1"])
    y = jax.nn.relu(bn(y, params["gamma1"], params["beta1"], params["mean1"], params["var1"]))
    y = conv(y, params["w2"], params["b2"])
    y = bn(y, params["gamma2"], params["beta2"], params["mean2"], params["var2"])
    return jax.nn.relu(x + y)


# ---------------------------------------------------------------------------
if __name__ == "__main__":
    N, C, H, W = 2, 8, 16, 16            # W*C = 128 -> lane-dense rows
    key = jax.random.PRNGKey(0)
    ks = jax.random.split(key, 13)

    params = {
        "w1":     0.1 * jax.random.normal(ks[0], (3, 3, C, C), jnp.float32),  # HWIO
        "b1":     0.1 * jax.random.normal(ks[1], (C,), jnp.float32),
        "gamma1": 1.0 + 0.1 * jax.random.normal(ks[2], (C,), jnp.float32),
        "beta1":  0.1 * jax.random.normal(ks[3], (C,), jnp.float32),
        "mean1":  0.05 * jax.random.normal(ks[4], (C,), jnp.float32),
        "var1":   1.0 + 0.1 * jax.random.uniform(ks[5], (C,), jnp.float32),
        "w2":     0.1 * jax.random.normal(ks[6], (3, 3, C, C), jnp.float32),
        "b2":     0.1 * jax.random.normal(ks[7], (C,), jnp.float32),
        "gamma2": 1.0 + 0.1 * jax.random.normal(ks[8], (C,), jnp.float32),
        "beta2":  0.1 * jax.random.normal(ks[9], (C,), jnp.float32),
        "mean2":  0.05 * jax.random.normal(ks[10], (C,), jnp.float32),
        "var2":   1.0 + 0.1 * jax.random.uniform(ks[11], (C,), jnp.float32),
    }
    x = jax.random.normal(ks[12], (N, C, H, W), jnp.float32)

    ref = jax.block_until_ready(res_block_reference(x, params))

    # Exact path (fp32 MXU operands) -> tight tolerance.
    out_f32 = jax.block_until_ready(res_block_forward(x, params, compute_dtype=jnp.float32))
    assert out_f32.shape == (N, C, H, W)
    assert jnp.allclose(out_f32, ref, atol=1e-3, rtol=1e-3), \
        f"fp32 max abs err = {jnp.max(jnp.abs(out_f32 - ref))}"

    # Fast path (bf16 MXU operands, fp32 accumulation; v6e/v7x optimization).
    # bf16 rounding of activations/weights gives ~1e-2 worst-case abs error here,
    # hence the looser tolerance.
    out_bf16 = jax.block_until_ready(res_block_forward(x, params, compute_dtype=jnp.bfloat16))
    assert out_bf16.shape == (N, C, H, W)
    assert jnp.allclose(out_bf16, ref, atol=3e-2, rtol=3e-2), \
        f"bf16 max abs err = {jnp.max(jnp.abs(out_bf16 - ref))}"

    print("KERNEL_OK")
</pallas_src>

<mosaic_0001>
module attributes {stable_mosaic.version = 11 : i64} {
  func.func @resblock_kernel(%arg0: i32, %arg1: memref<1x16x128xf32, #tpu.memory_space<vmem>>, %arg2: memref<384x128xf32, #tpu.memory_space<vmem>>, %arg3: memref<1x128xf32, #tpu.memory_space<vmem>>, %arg4: memref<384x128xf32, #tpu.memory_space<vmem>>, %arg5: memref<1x128xf32, #tpu.memory_space<vmem>>, %arg6: memref<1x16x128xf32, #tpu.memory_space<vmem>>, %arg7: memref<18x128xf32, #tpu.memory_space<vmem>>) attributes {dimension_semantics = [#tpu.dimension_semantics<parallel>], iteration_bounds = array<i64: 2>, scalar_prefetch = 0 : i64, scratch_operands = 1 : i64, tpu.core_type = #tpu.core_type<tc>, window_params = [{transform_indices = @transform_0, window_bounds = array<i64: 1, 16, 128>}, {pipeline_mode = #tpu.pipeline_mode<synchronous>, transform_indices = @transform_1, window_bounds = array<i64: 384, 128>}, {pipeline_mode = #tpu.pipeline_mode<synchronous>, transform_indices = @transform_2, window_bounds = array<i64: 1, 128>}, {pipeline_mode = #tpu.pipeline_mode<synchronous>, transform_indices = @transform_3, window_bounds = array<i64: 384, 128>}, {pipeline_mode = #tpu.pipeline_mode<synchronous>, transform_indices = @transform_4, window_bounds = array<i64: 1, 128>}, {transform_indices = @transform_5, window_bounds = array<i64: 1, 16, 128>}]} {
    %c0 = arith.constant 0 : index
    %c0_0 = arith.constant 0 : index
    %c0_1 = arith.constant 0 : index
    %0 = vector.load %arg1[%c0, %c0_0, %c0_1] : memref<1x16x128xf32, #tpu.memory_space<vmem>>, vector<1x16x128xf32>
    %1 = vector.shape_cast %0 : vector<1x16x128xf32> to vector<16x128xf32>
    %cst = arith.constant 0.000000e+00 : f32
    %2 = vector.broadcast %cst : f32 to vector<1x128xf32>
    %c0_2 = arith.constant 0 : index
    %c0_3 = arith.constant 0 : index
    %3 = vector.load %arg7[%c0_2, %c0_3] : memref<18x128xf32, #tpu.memory_space<vmem>>, vector<1x128xf32>
    tpu.vector_store %arg7[%c0_2, %c0_3], %2 {strides = array<i32>} : memref<18x128xf32, #tpu.memory_space<vmem>>, vector<1x128xf32>,
    %c17 = arith.constant 17 : index
    %c0_4 = arith.constant 0 : index
    %4 = vector.load %arg7[%c17, %c0_4] : memref<18x128xf32, #tpu.memory_space<vmem>>, vector<1x128xf32>
    tpu.vector_store %arg7[%c17, %c0_4], %2 {strides = array<i32>} : memref<18x128xf32, #tpu.memory_space<vmem>>, vector<1x128xf32>,
    %c1 = arith.constant 1 : index
    %c0_5 = arith.constant 0 : index
    %5 = vector.load %arg7[%c1, %c0_5] : memref<18x128xf32, #tpu.memory_space<vmem>>, vector<16x128xf32>
    tpu.vector_store %arg7[%c1, %c0_5], %1 {strides = array<i32>} : memref<18x128xf32, #tpu.memory_space<vmem>>, vector<16x128xf32>,
    %c0_6 = arith.constant 0 : index
    %c0_7 = arith.constant 0 : index
    %6 = vector.load %arg7[%c0_6, %c0_7] : memref<18x128xf32, #tpu.memory_space<vmem>>, vector<16x128xf32>
    %c1_8 = arith.constant 1 : index
    %c0_9 = arith.constant 0 : index
    %7 = vector.load %arg7[%c1_8, %c0_9] : memref<18x128xf32, #tpu.memory_space<vmem>>, vector<16x128xf32>
    %c2 = arith.constant 2 : index
    %c0_10 = arith.constant 0 : index
    %8 = vector.load %arg7[%c2, %c0_10] : memref<18x128xf32, #tpu.memory_space<vmem>>, vector<16x128xf32>
    %9 = tpu.concatenate %6, %7, %8 in 1 : vector<16x128xf32>, vector<16x128xf32>, vector<16x128xf32> -> vector<16x384xf32>
    %c0_11 = arith.constant 0 : index
    %c0_12 = arith.constant 0 : index
    %10 = vector.load %arg2[%c0_11, %c0_12] : memref<384x128xf32, #tpu.memory_space<vmem>>, vector<384x128xf32>
    %cst_13 = arith.constant dense<0.000000e+00> : vector<16x128xf32>
    %11 = tpu.matmul %9, %10, %cst_13 {dimension_numbers = #tpu.dot_dimension_numbers<[1], [0], [0], [1], [0, 0, 1, 1], [], []>} : vector<16x384xf32>, vector<384x128xf32>, vector<16x128xf32> -> vector<16x128xf32>
    %c0_14 = arith.constant 0 : index
    %c0_15 = arith.constant 0 : index
    %12 = vector.load %arg3[%c0_14, %c0_15] : memref<1x128xf32, #tpu.memory_space<vmem>>, vector<1x128xf32>
    %13 = vector.broadcast %12 : vector<1x128xf32> to vector<16x128xf32>
    %14 = arith.addf %11, %13 : vector<16x128xf32>
    %cst_16 = arith.constant 0.000000e+00 : f32
    %15 = vector.broadcast %cst_16 : f32 to vector<16x128xf32>
    %16 = arith.maximumf %14, %15 : vector<16x128xf32>
    %c1_17 = arith.constant 1 : index
    %c0_18 = arith.constant 0 : index
    %17 = vector.load %arg7[%c1_17, %c0_18] : memref<18x128xf32, #tpu.memory_space<vmem>>, vector<16x128xf32>
    tpu.vector_store %arg7[%c1_17, %c0_18], %16 {strides = array<i32>} : memref<18x128xf32, #tpu.memory_space<vmem>>, vector<16x128xf32>,
    %c0_19 = arith.constant 0 : index
    %c0_20 = arith.constant 0 : index
    %18 = vector.load %arg7[%c0_19, %c0_20] : memref<18x128xf32, #tpu.memory_space<vmem>>, vector<16x128xf32>
    %c1_21 = arith.constant 1 : index
    %c0_22 = arith.constant 0 : index
    %19 = vector.load %arg7[%c1_21, %c0_22] : memref<18x128xf32, #tpu.memory_space<vmem>>, vector<16x128xf32>
    %c2_23 = arith.constant 2 : index
    %c0_24 = arith.constant 0 : index
    %20 = vector.load %arg7[%c2_23, %c0_24] : memref<18x128xf32, #tpu.memory_space<vmem>>, vector<16x128xf32>
    %21 = tpu.concatenate %18, %19, %20 in 1 : vector<16x128xf32>, vector<16x128xf32>, vector<16x128xf32> -> vector<16x384xf32>
    %c0_25 = arith.constant 0 : index
    %c0_26 = arith.constant 0 : index
    %22 = vector.load %arg4[%c0_25, %c0_26] : memref<384x128xf32, #tpu.memory_space<vmem>>, vector<384x128xf32>
    %cst_27 = arith.constant dense<0.000000e+00> : vector<16x128xf32>
    %23 = tpu.matmul %21, %22, %cst_27 {dimension_numbers = #tpu.dot_dimension_numbers<[1], [0], [0], [1], [0, 0, 1, 1], [], []>} : vector<16x384xf32>, vector<384x128xf32>, vector<16x128xf32> -> vector<16x128xf32>
    %c0_28 = arith.constant 0 : index
    %c0_29 = arith.constant 0 : index
    %24 = vector.load %arg5[%c0_28, %c0_29] : memref<1x128xf32, #tpu.memory_space<vmem>>, vector<1x128xf32>
    %25 = vector.broadcast %24 : vector<1x128xf32> to vector<16x128xf32>
    %26 = arith.addf %23, %25 : vector<16x128xf32>
    %27 = arith.addf %1, %26 : vector<16x128xf32>
    %cst_30 = arith.constant 0.000000e+00 : f32
    %28 = vector.broadcast %cst_30 : f32 to vector<16x128xf32>
    %29 = arith.maximumf %27, %28 : vector<16x128xf32>
    %c0_31 = arith.constant 0 : index
    %c0_32 = arith.constant 0 : index
    %c0_33 = arith.constant 0 : index
    %30 = vector.load %arg6[%c0_31, %c0_32, %c0_33] : memref<1x16x128xf32, #tpu.memory_space<vmem>>, vector<1x16x128xf32>
    %31 = vector.shape_cast %30 : vector<1x16x128xf32> to vector<16x128xf32>
    %32 = vector.shape_cast %29 : vector<16x128xf32> to vector<1x16x128xf32>
    tpu.vector_store %arg6[%c0_31, %c0_32, %c0_33], %32 {strides = array<i32>} : memref<1x16x128xf32, #tpu.memory_space<vmem>>, vector<1x16x128xf32>,
    return
  }
  func.func @transform_0(%arg0: i32) -> (i32, i32, i32) {
    %c0_i32 = arith.constant 0 : i32
    %c0_i32_0 = arith.constant 0 : i32
    %c0_i32_1 = arith.constant 0 : i32
    return %arg0, %c0_i32, %c0_i32_0 : i32, i32, i32
  }
  func.func @transform_1(%arg0: i32) -> (i32, i32) {
    %c0_i32 = arith.constant 0 : i32
    %c0_i32_0 = arith.constant 0 : i32
    %c0_i32_1 = arith.constant 0 : i32
    return %c0_i32, %c0_i32_0 : i32, i32
  }
  func.func @transform_2(%arg0: i32) -> (i32, i32) {
    %c0_i32 = arith.constant 0 : i32
    %c0_i32_0 = arith.constant 0 : i32
    %c0_i32_1 = arith.constant 0 : i32
    return %c0_i32, %c0_i32_0 : i32, i32
  }
  func.func @transform_3(%arg0: i32) -> (i32, i32) {
    %c0_i32 = arith.constant 0 : i32
    %c0_i32_0 = arith.constant 0 : i32
    %c0_i32_1 = arith.constant 0 : i32
    return %c0_i32, %c0_i32_0 : i32, i32
  }
  func.func @transform_4(%arg0: i32) -> (i32, i32) {
    %c0_i32 = arith.constant 0 : i32
    %c0_i32_0 = arith.constant 0 : i32
    %c0_i32_1 = arith.constant 0 : i32
    return %c0_i32, %c0_i32_0 : i32, i32
  }
  func.func @transform_5(%arg0: i32) -> (i32, i32, i32) {
    %c0_i32 = arith.constant 0 : i32
    %c0_i32_0 = arith.constant 0 : i32
    %c0_i32_1 = arith.constant 0 : i32
    return %arg0, %c0_i32, %c0_i32_0 : i32, i32, i32
  }
}

</mosaic_0001>

<llo_original>
// kernel: tpu_custom_call.1
$region0: #{tpu_custom_call.1}
  #allocation0 [shape = 'u32[]', space=smem, size = 0x4, offset = 0x4, fixed_abs, tag = 'smem constant byte address 0x4 - core index']
  #allocation1 [shape = 'u32[144,128]{1,0:T(1,128)}', space=vmem, size = 0x12000, scoped, tag = 'internal scratch']
  #allocation2 [shape = 'f32[18,128]{1,0:T(8,128)}', space=vmem, size = 0x3000, scoped, tag = 'scratch operand']
  %s0 = inlined_call_operand.hbm [shape: f32[2,16,128], index: 0, kind: input, shape index: {}]
  %s1 = inlined_call_operand.hbm [shape: f32[384,128], index: 1, kind: input, shape index: {}]
  %s2 = inlined_call_operand.vmem [shape: f32[1,128], index: 2, kind: input, shape index: {}]
  %s3 = inlined_call_operand.hbm [shape: f32[384,128], index: 3, kind: input, shape index: {}]
  %s4 = inlined_call_operand.vmem [shape: f32[1,128], index: 4, kind: input, shape index: {}]
  %s5 = inlined_call_operand.hbm [shape: f32[2,16,128], index: 5, kind: output, shape index: {}]
  %s6 = sld [smem:[#allocation0]]
  $region65: #{tpu_custom_call.1} parent=0
    _
  %s8 = ssub.s32 1, %s6
  %s9 = scalar_select 0, %s8, %s6
  $region1: #{tpu_custom_call.1} parent=0
    #allocation3 [shape = 'u8[16384]{0}', space=vmem, size = 0x4000, scoped, tag = 'input window, operand 0']
    #allocation4 [shape = 's32[2]{0}', space=sflag, size = 0x8, scoped, tag = 'scoped memory for tpu_custom_call.1']
    #allocation5 [shape = 's32[2]{0}', space=sflag, size = 0x8, scoped, tag = 'scoped memory for tpu_custom_call.1']
    #allocation6 [shape = 'u8[196608]{0}', space=vmem, size = 0x30000, scoped, tag = 'input window, operand 1, single buffered']
    #allocation7 [shape = 's32[1]{0}', space=sflag, size = 0x4, scoped, tag = 'scoped memory for tpu_custom_call.1']
    #allocation8 [shape = 'u8[196608]{0}', space=vmem, size = 0x30000, scoped, tag = 'input window, operand 3, single buffered']
    #allocation9 [shape = 'u8[16384]{0}', space=vmem, size = 0x4000, scoped, tag = 'output window, operand 0']
    %10 = vsyncpa [#allocation4], 0
    %s11 = scalar_lea.sflag [#allocation4], 1
    %12 = vsyncpa %s11, 0
    %13 = vsyncpa [#allocation7], 0
    %14 = vsyncpa [#allocation5], 0
    %s15 = scalar_lea.sflag [#allocation5], 1
    %16 = vsyncpa %s15, 0
    loop: start=0, step=1, limit=4
    $region2: #{tpu_custom_call.1} parent=1 // loop_pre_header
      _
    $region3: #{tpu_custom_call.1} parent=1 // loop_header
      %s18 = sphi 0, %s22
      %p19 = scmp.ge.s32.totalorder %s18, 4
      %s28 = sphi 0, %s30
      %s31 = sphi 0, %s28
      %s32 = sphi 0, %s31
      %s48 = sphi 0, %s32
      %s52 = sphi 0, %s52
      %s54 = sphi 0, %s52
      %s55 = sphi 0, %s54
      %s69 = sphi 0, %s55
      %s73 = sphi 0, %s73
      %s75 = sphi 0, %s73
      %s76 = sphi 0, %s75
      %s90 = sphi 0, %s76
      %s94 = sphi 0, %s94
      %s96 = sphi 0, %s94
      %s97 = sphi 0, %s96
      %s111 = sphi 0, %s97
      %s115 = sphi 0, %s115
      %s117 = sphi 0, %s115
      %s118 = sphi 0, %s117
      %s132 = sphi 0, %s118
      %s138 = sphi 0, %s140
      %s141 = sphi 0, %s138
      %s142 = sphi 0, %s141
      %s158 = sphi 0, %s142
    $region4: #{tpu_custom_call.1} parent=1 // loop_header_branch
      %21 = sbr.rel (%p19) target = $region8
    $region5: #{tpu_custom_call.1} parent=1 // loop_body
      %s23 = ssub.s32 %s18, 1
      %s24 = ssub.s32 %s18, 2
      %s25 = sadd.s32 %s18, 1
      %s26 = ssub.s32 %s18, %s25
      %p27 = scmp.eq.s32.totalorder %s26, 0
      %s29 = sadd.s32 %s28, 1
      %s30 = scalar_select %p27, %s28, %s29
      %p33 = pneg %p27
      %p34 = scmp.eq.s32.totalorder %s18, 1
      %p35 = por %p33, %p34
      %p36 = scmp.ne.s32.totalorder %s28, %s31
      %p37 = scmp.eq.s32.totalorder %s18, 0
      %p38 = por %p36, %p37
      %p39 = scmp.ne.s32.totalorder %s28, %s31
      %p40 = scmp.eq.s32.totalorder %s23, 1
      %p41 = por %p39, %p40
      %p42 = scmp.ne.s32.totalorder %s31, %s32
      %p43 = scmp.eq.s32.totalorder %s23, 0
      %p44 = por %p42, %p43
      %p45 = scmp.ne.s32.totalorder %s31, %s32
      %p46 = scmp.eq.s32.totalorder %s24, 1
      %p47 = por %p45, %p46
      %p49 = scmp.ne.s32.totalorder %s32, %s48
      %p50 = scmp.eq.s32.totalorder %s24, 0
      %p51 = por %p49, %p50
      %s53 = sadd.s32 %s52, 1
      %p56 = scmp.eq.s32.totalorder %s18, 1
      %p57 = scmp.ne.s32.totalorder %s52, %s54
      %p58 = scmp.eq.s32.totalorder %s18, 0
      %p59 = por %p57, %p58
      %p60 = scmp.ne.s32.totalorder %s52, %s54
      %p61 = scmp.eq.s32.totalorder %s23, 1
      %p62 = por %p60, %p61
      %p63 = scmp.ne.s32.totalorder %s54, %s55
      %p64 = scmp.eq.s32.totalorder %s23, 0
      %p65 = por %p63, %p64
      %p66 = scmp.ne.s32.totalorder %s54, %s55
      %p67 = scmp.eq.s32.totalorder %s24, 1
      %p68 = por %p66, %p67
      %p70 = scmp.ne.s32.totalorder %s55, %s69
      %p71 = scmp.eq.s32.totalorder %s24, 0
      %p72 = por %p70, %p71
      %s74 = sadd.s32 %s73, 1
      %p77 = scmp.eq.s32.totalorder %s18, 1
      %p78 = scmp.ne.s32.totalorder %s73, %s75
      %p79 = scmp.eq.s32.totalorder %s18, 0
      %p80 = por %p78, %p79
      %p81 = scmp.ne.s32.totalorder %s73, %s75
      %p82 = scmp.eq.s32.totalorder %s23, 1
      %p83 = por %p81, %p82
      %p84 = scmp.ne.s32.totalorder %s75, %s76
      %p85 = scmp.eq.s32.totalorder %s23, 0
      %p86 = por %p84, %p85
      %p87 = scmp.ne.s32.totalorder %s75, %s76
      %p88 = scmp.eq.s32.totalorder %s24, 1
      %p89 = por %p87, %p88
      %p91 = scmp.ne.s32.totalorder %s76, %s90
      %p92 = scmp.eq.s32.totalorder %s24, 0
      %p93 = por %p91, %p92
      %s95 = sadd.s32 %s94, 1
      %p98 = scmp.eq.s32.totalorder %s18, 1
      %p99 = scmp.ne.s32.totalorder %s94, %s96
      %p100 = scmp.eq.s32.totalorder %s18, 0
      %p101 = por %p99, %p100
      %p102 = scmp.ne.s32.totalorder %s94, %s96
      %p103 = scmp.eq.s32.totalorder %s23, 1
      %p104 = por %p102, %p103
      %p105 = scmp.ne.s32.totalorder %s96, %s97
      %p106 = scmp.eq.s32.totalorder %s23, 0
      %p107 = por %p105, %p106
      %p108 = scmp.ne.s32.totalorder %s96, %s97
      %p109 = scmp.eq.s32.totalorder %s24, 1
      %p110 = por %p108, %p109
      %p112 = scmp.ne.s32.totalorder %s97, %s111
      %p113 = scmp.eq.s32.totalorder %s24, 0
      %p114 = por %p112, %p113
      %s116 = sadd.s32 %s115, 1
      %p119 = scmp.eq.s32.totalorder %s18, 1
      %p120 = scmp.ne.s32.totalorder %s115, %s117
      %p121 = scmp.eq.s32.totalorder %s18, 0
      %p122 = por %p120, %p121
      %p123 = scmp.ne.s32.totalorder %s115, %s117
      %p124 = scmp.eq.s32.totalorder %s23, 1
      %p125 = por %p123, %p124
      %p126 = scmp.ne.s32.totalorder %s117, %s118
      %p127 = scmp.eq.s32.totalorder %s23, 0
      %p128 = por %p126, %p127
      %p129 = scmp.ne.s32.totalorder %s117, %s118
      %p130 = scmp.eq.s32.totalorder %s24, 1
      %p131 = por %p129, %p130
      %p133 = scmp.ne.s32.totalorder %s118, %s132
      %p134 = scmp.eq.s32.totalorder %s24, 0
      %p135 = por %p133, %p134
      %s136 = ssub.s32 %s18, %s25
      %p137 = scmp.eq.s32.totalorder %s136, 0
      %s139 = sadd.s32 %s138, 1
      %s140 = scalar_select %p137, %s138, %s139
      %p143 = pneg %p137
      %p144 = scmp.eq.s32.totalorder %s18, 1
      %p145 = por %p143, %p144
      %p146 = scmp.ne.s32.totalorder %s138, %s141
      %p147 = scmp.eq.s32.totalorder %s18, 0
      %p148 = por %p146, %p147
      %p149 = scmp.ne.s32.totalorder %s138, %s141
      %p150 = scmp.eq.s32.totalorder %s23, 1
      %p151 = por %p149, %p150
      %p152 = scmp.ne.s32.totalorder %s141, %s142
      %p153 = scmp.eq.s32.totalorder %s23, 0
      %p154 = por %p152, %p153
      %p155 = scmp.ne.s32.totalorder %s141, %s142
      %p156 = scmp.eq.s32.totalorder %s24, 1
      %p157 = por %p155, %p156
      %p159 = scmp.ne.s32.totalorder %s142, %s158
      %p160 = scmp.eq.s32.totalorder %s24, 0
      %p161 = por %p159, %p160
      %p162 = scmp.le.s32.totalorder 1, %s18
      %p163 = scmp.lt.s32.totalorder %s18, 3
      %p164 = pnand %p162, %p163
      %p165 = pneg %p164
      // Predicated region
      $region9: #{tpu_custom_call.1} parent=5 // pred_check
        _
      $region10: #{tpu_custom_call.1} parent=5 // pred_check_branch
        %167 = sbr.rel (%p164) target = $region12
      $region11: #{tpu_custom_call.1} parent=5 // pred_region
        %s168 = ssub.s32 %s18, 1
        // Predicated region
        $region13: #{tpu_custom_call.1} parent=11 // pred_check
          %p169 = pneg %p65
        $region14: #{tpu_custom_call.1} parent=11 // pred_check_branch
          %171 = sbr.rel (%p169) target = $region16
        $region15: #{tpu_custom_call.1} parent=11 // pred_region
          %s173 = ssub.s32 6144, 6144
          %174 = vsyncadd [#allocation7], %s173
          %s175 = sshll.u32 [#allocation6], 4
          %s176 = int_to_ptr.vmem [resolvable:$true] %s175
          %181 = dma.hbm_to_vmem [thread:$0]  %s1, 6144, %s176, [#allocation7], 128, 128, 8
        $region16: #{tpu_custom_call.1} parent=11 // pred_fallthru
          _
        // Predicated region
        $region17: #{tpu_custom_call.1} parent=11 // pred_check
          %p182 = pneg %p86
        $region18: #{tpu_custom_call.1} parent=11 // pred_check_branch
          %184 = sbr.rel (%p182) target = $region20
        $region19: #{tpu_custom_call.1} parent=11 // pred_region
          _
        $region20: #{tpu_custom_call.1} parent=11 // pred_fallthru
          _
        // Predicated region
        $region21: #{tpu_custom_call.1} parent=11 // pred_check
          %p185 = pneg %p107
        $region22: #{tpu_custom_call.1} parent=11 // pred_check_branch
          %187 = sbr.rel (%p185) target = $region24
        $region23: #{tpu_custom_call.1} parent=11 // pred_region
          %s189 = ssub.s32 6144, 6144
          %190 = vsyncadd [#allocation7], %s189
          %s191 = sshll.u32 [#allocation8], 4
          %s192 = int_to_ptr.vmem [resolvable:$true] %s191
          %197 = dma.hbm_to_vmem [thread:$0]  %s3, 6144, %s192, [#allocation7], 128, 128, 8
        $region24: #{tpu_custom_call.1} parent=11 // pred_fallthru
          _
        // Predicated region
        $region25: #{tpu_custom_call.1} parent=11 // pred_check
          %p198 = pneg %p128
        $region26: #{tpu_custom_call.1} parent=11 // pred_check_branch
          %200 = sbr.rel (%p198) target = $region28
        $region27: #{tpu_custom_call.1} parent=11 // pred_region
          _
        $region28: #{tpu_custom_call.1} parent=11 // pred_fallthru
          _
      $region12: #{tpu_custom_call.1} parent=5 // pred_fallthru
        _
      %p201 = scmp.lt.s32.totalorder %s18, 2
      // Predicated region
      $region29: #{tpu_custom_call.1} parent=5 // pred_check
        %p202 = pneg %p201
      $region30: #{tpu_custom_call.1} parent=5 // pred_check_branch
        %204 = sbr.rel (%p202) target = $region32
      $region31: #{tpu_custom_call.1} parent=5 // pred_region
        // Predicated region
        $region33: #{tpu_custom_call.1} parent=31 // pred_check
          %p205 = pneg %p38
        $region34: #{tpu_custom_call.1} parent=31 // pred_check_branch
          %207 = sbr.rel (%p205) target = $region36
        $region35: #{tpu_custom_call.1} parent=31 // pred_region
          %s208 = sand.u32 %s28, 1
          %s209 = scalar_lea.sflag [#allocation4], %s208
          %s210 = sand.u32 %s28, 1
          %s211 = smul.addr %s210, 16
          %s212 = scalar_lea.vmem [#allocation3], %s211
          %s214 = ssub.s32 256, 256
          %215 = vsyncadd %s209, %s214
          %s216 = smul.addr %s18, 2
          %s217 = smul.addr %s216, 128
          %s218 = scalar_lea.hbm %s0, %s217
          %s219 = sshll.u32 %s212, 4
          %s220 = int_to_ptr.vmem [resolvable:$true] %s219
          %225 = dma.hbm_to_vmem [thread:$0]  %s218, 256, %s220, %s209, 128, 128, 8
        $region36: #{tpu_custom_call.1} parent=31 // pred_fallthru
          _
      $region32: #{tpu_custom_call.1} parent=5 // pred_fallthru
        _
      %p226 = scmp.le.s32.totalorder 1, %s18
      %p227 = scmp.lt.s32.totalorder %s18, 3
      %p228 = pnand %p226, %p227
      %p229 = pneg %p228
      // Predicated region
      $region37: #{tpu_custom_call.1} parent=5 // pred_check
        _
      $region38: #{tpu_custom_call.1} parent=5 // pred_check_branch
        %231 = sbr.rel (%p228) target = $region40
      $region39: #{tpu_custom_call.1} parent=5 // pred_region
        %s232 = ssub.s32 %s18, 1
        %s233 = sand.u32 %s31, 1
        %s234 = scalar_lea.sflag [#allocation4], %s233
        %s235 = sand.u32 %s31, 1
        %s236 = smul.addr %s235, 16
        %s237 = scalar_lea.vmem [#allocation3], %s236
        // Predicated region
        $region41: #{tpu_custom_call.1} parent=39 // pred_check
          %p238 = pneg %p44
        $region42: #{tpu_custom_call.1} parent=39 // pred_check_branch
          %240 = sbr.rel (%p238) target = $region44
        $region43: #{tpu_custom_call.1} parent=39 // pred_region
          %241 = dma.done %s234, 256
        $region44: #{tpu_custom_call.1} parent=39 // pred_fallthru
          _
        // Predicated region
        $region45: #{tpu_custom_call.1} parent=39 // pred_check
          %p242 = pneg %p65
        $region46: #{tpu_custom_call.1} parent=39 // pred_check_branch
          %244 = sbr.rel (%p242) target = $region48
        $region47: #{tpu_custom_call.1} parent=39 // pred_region
          %245 = dma.done [#allocation7], 6144
        $region48: #{tpu_custom_call.1} parent=39 // pred_fallthru
          _
        // Predicated region
        $region49: #{tpu_custom_call.1} parent=39 // pred_check
          %p246 = pneg %p107
        $region50: #{tpu_custom_call.1} parent=39 // pred_check_branch
          %248 = sbr.rel (%p246) target = $region52
        $region51: #{tpu_custom_call.1} parent=39 // pred_region
          %249 = dma.done [#allocation7], 6144
        $region52: #{tpu_custom_call.1} parent=39 // pred_fallthru
          _
        %s250 = sand.u32 %s31, 1
        %s251 = scalar_lea.sflag [#allocation4], %s250
        %s252 = sand.u32 %s31, 1
        %s253 = smul.addr %s252, 16
        %s254 = scalar_lea.vmem [#allocation3], %s253
        %p255 = pneg %p44
        %p256 = pneg %p41
        %p257 = pneg %p65
        %p258 = pneg %p62
        %p259 = pneg %p86
        %p260 = pneg %p83
        %p261 = pneg %p107
        %p262 = pneg %p104
        %p263 = pneg %p128
        %p264 = pneg %p125
        %p265 = pneg %p154
        %p266 = pneg %p151
        %s267 = sand.u32 %s141, 1
        %s268 = scalar_lea.sflag [#allocation5], %s267
        %s269 = sand.u32 %s141, 1
        %s270 = smul.addr %s269, 16
        %s271 = scalar_lea.vmem [#allocation9], %s270
        %v272 = vld [vmem:[%s237] sm:$0xff]
        %v273 = vld [vmem:[%s237 + $0x8] sm:$0xff]
        %274 = vst [vmem:[#allocation2] sm:$0x1] 0.0
        %275 = vst [vmem:[#allocation2 + $0x11] sm:$0x1] 0.0
        %276 = vst [vmem:[#allocation2 + $0x1] sm:$0xff] %v272
        %277 = vst [vmem:[#allocation2 + $0x9] sm:$0xff] %v273
        %v278 = vld [vmem:[#allocation2] sm:$0xff]
        %v279 = vld [vmem:[#allocation2 + $0x8] sm:$0xff]
        %v280 = vld [vmem:[#allocation2 + $0x1] sm:$0xff]
        %v281 = vld [vmem:[#allocation2 + $0x9] sm:$0xff]
        %v282 = vld [vmem:[#allocation2 + $0x2] sm:$0xff]
        %v283 = vld [vmem:[#allocation2 + $0xa] sm:$0xff]
        %v284 = vld [vmem:[#allocation6] sm:$0xff]
        %v285 = vld [vmem:[#allocation6 + $0x8] sm:$0xff]
        %v286 = vld [vmem:[#allocation6 + $0x10] sm:$0xff]
        %v287 = vld [vmem:[#allocation6 + $0x18] sm:$0xff]
        %v288 = vld [vmem:[#allocation6 + $0x20] sm:$0xff]
        %v289 = vld [vmem:[#allocation6 + $0x28] sm:$0xff]
        %v290 = vld [vmem:[#allocation6 + $0x30] sm:$0xff]
        %v291 = vld [vmem:[#allocation6 + $0x38] sm:$0xff]
        %v292 = vld [vmem:[#allocation6 + $0x40] sm:$0xff]
        %v293 = vld [vmem:[#allocation6 + $0x48] sm:$0xff]
        %v294 = vld [vmem:[#allocation6 + $0x50] sm:$0xff]
        %v295 = vld [vmem:[#allocation6 + $0x58] sm:$0xff]
        %v296 = vld [vmem:[#allocation6 + $0x60] sm:$0xff]
        %v297 = vld [vmem:[#allocation6 + $0x68] sm:$0xff]
        %v298 = vld [vmem:[#allocation6 + $0x70] sm:$0xff]
        %v299 = vld [vmem:[#allocation6 + $0x78] sm:$0xff]
        %v300 = vld [vmem:[#allocation6 + $0x80] sm:$0xff]
        %v301 = vld [vmem:[#allocation6 + $0x88] sm:$0xff]
        %v302 = vld [vmem:[#allocation6 + $0x90] sm:$0xff]
        %v303 = vld [vmem:[#allocation6 + $0x98] sm:$0xff]
        %v304 = vld [vmem:[#allocation6 + $0xa0] sm:$0xff]
        %v305 = vld [vmem:[#allocation6 + $0xa8] sm:$0xff]
        %v306 = vld [vmem:[#allocation6 + $0xb0] sm:$0xff]
        %v307 = vld [vmem:[#allocation6 + $0xb8] sm:$0xff]
        %v308 = vld [vmem:[#allocation6 + $0xc0] sm:$0xff]
        %v309 = vld [vmem:[#allocation6 + $0xc8] sm:$0xff]
        %v310 = vld [vmem:[#allocation6 + $0xd0] sm:$0xff]
        %v311 = vld [vmem:[#allocation6 + $0xd8] sm:$0xff]
        %v312 = vld [vmem:[#allocation6 + $0xe0] sm:$0xff]
        %v313 = vld [vmem:[#allocation6 + $0xe8] sm:$0xff]
        %v314 = vld [vmem:[#allocation6 + $0xf0] sm:$0xff]
        %v315 = vld [vmem:[#allocation6 + $0xf8] sm:$0xff]
        %v316 = vld [vmem:[#allocation6 + $0x100] sm:$0xff]
        %v317 = vld [vmem:[#allocation6 + $0x108] sm:$0xff]
        %v318 = vld [vmem:[#allocation6 + $0x110] sm:$0xff]
        %v319 = vld [vmem:[#allocation6 + $0x118] sm:$0xff]
        %v320 = vld [vmem:[#allocation6 + $0x120] sm:$0xff]
        %v321 = vld [vmem:[#allocation6 + $0x128] sm:$0xff]
        %v322 = vld [vmem:[#allocation6 + $0x130] sm:$0xff]
        %v323 = vld [vmem:[#allocation6 + $0x138] sm:$0xff]
        %v324 = vld [vmem:[#allocation6 + $0x140] sm:$0xff]
        %v325 = vld [vmem:[#allocation6 + $0x148] sm:$0xff]
        %v326 = vld [vmem:[#allocation6 + $0x150] sm:$0xff]
        %v327 = vld [vmem:[#allocation6 + $0x158] sm:$0xff]
        %v328 = vld [vmem:[#allocation6 + $0x160] sm:$0xff]
        %v329 = vld [vmem:[#allocation6 + $0x168] sm:$0xff]
        %v330 = vld [vmem:[#allocation6 + $0x170] sm:$0xff]
        %v331 = vld [vmem:[#allocation6 + $0x178] sm:$0xff]
        %v332 = vld [vmem:[%s2] sm:$0x1]
        %v334 = vlaneseq
        %v335 = vshrl.u32 %v334, 7
        %v336 = vsub.s32 0, %v335
        %v337 = vrot.slane %v332, %v336
        %339 = vmatprep.subr.mxu0 0.0
        %340 = vmatpush1.msra.mxu0 %v284
        %341 = vmatprep.subr.mxu0 0.0
        %342 = vmatpush1.msra.mxu0 %v285
        %343 = vmatprep.subr.mxu0 0.0
        %344 = vmatpush1.msra.mxu0 %v286
        %345 = vmatprep.subr.mxu0 0.0
        %346 = vmatpush1.msra.mxu0 %v287
        %347 = vmatprep.subr.mxu0 0.0
        %348 = vmatpush1.msra.mxu0 %v288
        %349 = vmatprep.subr.mxu0 0.0
        %350 = vmatpush1.msra.mxu0 %v289
        %351 = vmatprep.subr.mxu0 0.0
        %352 = vmatpush1.msra.mxu0 %v290
        %353 = vmatprep.subr.mxu0 0.0
        %354 = vmatpush1.msra.mxu0 %v291
        %355 = vmatprep.subr.mxu0 0.0
        %356 = vmatpush1.msra.mxu0 %v292
        %357 = vmatprep.subr.mxu0 0.0
        %358 = vmatpush1.msra.mxu0 %v293
        %359 = vmatprep.subr.mxu0 0.0
        %360 = vmatpush1.msra.mxu0 %v294
        %361 = vmatprep.subr.mxu0 0.0
        %362 = vmatpush1.msra.mxu0 %v295
        %363 = vmatprep.subr.mxu0 0.0
        %364 = vmatpush1.msra.mxu0 %v296
        %365 = vmatprep.subr.mxu0 0.0
        %366 = vmatpush1.msra.mxu0 %v297
        %367 = vmatprep.subr.mxu0 0.0
        %368 = vmatpush1.msra.mxu0 %v298
        %369 = vmatprep.subr.mxu0 0.0
        %370 = vmatpush1.msra.mxu0 %v299
        %371 = vmatprep.subr.mxu0 0.0
        %372 = vmatpush1.msra.mxu0 %v300
        %373 = vmatprep.subr.mxu0 0.0
        %374 = vmatpush1.msra.mxu0 %v301
        %375 = vmatprep.subr.mxu0 0.0
        %376 = vmatpush1.msra.mxu0 %v302
        %377 = vmatprep.subr.mxu0 0.0
        %378 = vmatpush1.msra.mxu0 %v303
        %379 = vmatprep.subr.mxu0 0.0
        %380 = vmatpush1.msra.mxu0 %v304
        %381 = vmatprep.subr.mxu0 0.0
        %382 = vmatpush1.msra.mxu0 %v305
        %383 = vmatprep.subr.mxu0 0.0
        %384 = vmatpush1.msra.mxu0 %v306
        %385 = vmatprep.subr.mxu0 0.0
        %386 = vmatpush1.msra.mxu0 %v307
        %387 = vmatprep.subr.mxu0 0.0
        %388 = vmatpush1.msra.mxu0 %v308
        %389 = vmatprep.subr.mxu0 0.0
        %390 = vmatpush1.msra.mxu0 %v309
        %391 = vmatprep.subr.mxu0 0.0
        %392 = vmatpush1.msra.mxu0 %v310
        %393 = vmatprep.subr.mxu0 0.0
        %394 = vmatpush1.msra.mxu0 %v311
        %395 = vmatprep.subr.mxu0 0.0
        %396 = vmatpush1.msra.mxu0 %v312
        %397 = vmatprep.subr.mxu0 0.0
        %398 = vmatpush1.msra.mxu0 %v313
        %399 = vmatprep.subr.mxu0 0.0
        %400 = vmatpush1.msra.mxu0 %v314
        %401 = vmatprep.subr.mxu0 0.0
        %402 = vmatpush1.msra.mxu0 %v315
        %403 = vmatprep.mubr.f32.mxu0 %v280
        %404 = vmatmul.mubr.f32.gmra.mrb[0].mxu0 %v278
        %v405 = vpop.f32.mrb[0].mxu0
        %v406 = vadd.f32 %v337, %v405
        %v407 = vpop.f32.mrb[0].mxu0
        %408 = vmatprep.mubr.f32.mxu0 %v281
        %409 = vmatmul.mubr.f32.gmra.mrb[0].mxu0 %v279
        %v410 = vpop.f32.mrb[0].mxu0
        %v411 = vadd.f32 %v337, %v410
        %v412 = vpop.f32.mrb[0].mxu0
        %413 = vdwg.mxu0
        %414 = vmatprep.subr.mxu0 0.0
        %415 = vmatpush1.msra.mxu0 %v316
        %416 = vmatprep.subr.mxu0 0.0
        %417 = vmatpush1.msra.mxu0 %v317
        %418 = vmatprep.subr.mxu0 0.0
        %419 = vmatpush1.msra.mxu0 %v318
        %420 = vmatprep.subr.mxu0 0.0
        %421 = vmatpush1.msra.mxu0 %v319
        %422 = vmatprep.subr.mxu0 0.0
        %423 = vmatpush1.msra.mxu0 %v320
        %424 = vmatprep.subr.mxu0 0.0
        %425 = vmatpush1.msra.mxu0 %v321
        %426 = vmatprep.subr.mxu0 0.0
        %427 = vmatpush1.msra.mxu0 %v322
        %428 = vmatprep.subr.mxu0 0.0
        %429 = vmatpush1.msra.mxu0 %v323
        %430 = vmatprep.subr.mxu0 0.0
        %431 = vmatpush1.msra.mxu0 %v324
        %432 = vmatprep.subr.mxu0 0.0
        %433 = vmatpush1.msra.mxu0 %v325
        %434 = vmatprep.subr.mxu0 0.0
        %435 = vmatpush1.msra.mxu0 %v326
        %436 = vmatprep.subr.mxu0 0.0
        %437 = vmatpush1.msra.mxu0 %v327
        %438 = vmatprep.subr.mxu0 0.0
        %439 = vmatpush1.msra.mxu0 %v328
        %440 = vmatprep.subr.mxu0 0.0
        %441 = vmatpush1.msra.mxu0 %v329
        %442 = vmatprep.subr.mxu0 0.0
        %443 = vmatpush1.msra.mxu0 %v330
        %444 = vmatprep.subr.mxu0 0.0
        %445 = vmatpush1.msra.mxu0 %v331
        %446 = vmatprep.subr.mxu0 0.0
        %447 = vmatpush1.msra.mxu0 0.0
        %448 = vmatprep.subr.mxu0 0.0
        %449 = vmatpush1.msra.mxu0 0.0
        %450 = vmatprep.subr.mxu0 0.0
        %451 = vmatpush1.msra.mxu0 0.0
        %452 = vmatprep.subr.mxu0 0.0
        %453 = vmatpush1.msra.mxu0 0.0
        %454 = vmatprep.subr.mxu0 0.0
        %455 = vmatpush1.msra.mxu0 0.0
        %456 = vmatprep.subr.mxu0 0.0
        %457 = vmatpush1.msra.mxu0 0.0
        %458 = vmatprep.subr.mxu0 0.0
        %459 = vmatpush1.msra.mxu0 0.0
        %460 = vmatprep.subr.mxu0 0.0
        %461 = vmatpush1.msra.mxu0 0.0
        %462 = vmatprep.subr.mxu0 0.0
        %463 = vmatpush1.msra.mxu0 0.0
        %464 = vmatprep.subr.mxu0 0.0
        %465 = vmatpush1.msra.mxu0 0.0
        %466 = vmatprep.subr.mxu0 0.0
        %467 = vmatpush1.msra.mxu0 0.0
        %468 = vmatprep.subr.mxu0 0.0
        %469 = vmatpush1.msra.mxu0 0.0
        %470 = vmatprep.subr.mxu0 0.0
        %471 = vmatpush1.msra.mxu0 0.0
        %472 = vmatprep.subr.mxu0 0.0
        %473 = vmatpush1.msra.mxu0 0.0
        %474 = vmatprep.subr.mxu0 0.0
        %475 = vmatpush1.msra.mxu0 0.0
        %476 = vmatprep.subr.mxu0 0.0
        %477 = vmatpush1.msra.mxu0 0.0
        %478 = vmatprep.mubr.f32.mxu0 0.0
        %479 = vmatmul.mubr.f32.gmra.mrb[0].mxu0 %v282
        %v480 = vpop.f32.mrb[0].mxu0
        %v481 = vadd.f32 %v406, %v480
        %v482 = vpop.f32.mrb[0].mxu0
        %483 = vmatprep.mubr.f32.mxu0 0.0
        %484 = vmatmul.mubr.f32.gmra.mrb[0].mxu0 %v283
        %v485 = vpop.f32.mrb[0].mxu0
        %v486 = vadd.f32 %v411, %v485
        %v487 = vpop.f32.mrb[0].mxu0
        %488 = vdwg.mxu0
        %v489 = vmax.f32 %v481, 0.0
        %v490 = vmax.f32 %v486, 0.0
        %491 = vst [vmem:[#allocation2 + $0x1] sm:$0xff] %v489
        %492 = vst [vmem:[#allocation2 + $0x9] sm:$0xff] %v490
        %v493 = vld [vmem:[#allocation2] sm:$0xff]
        %v494 = vld [vmem:[#allocation2 + $0x8] sm:$0xff]
        %v495 = vld [vmem:[#allocation2 + $0x1] sm:$0xff]
        %v496 = vld [vmem:[#allocation2 + $0x9] sm:$0xff]
        %v497 = vld [vmem:[#allocation2 + $0x2] sm:$0xff]
        %v498 = vld [vmem:[#allocation2 + $0xa] sm:$0xff]
        %v499 = vld [vmem:[#allocation8] sm:$0xff]
        %v500 = vld [vmem:[#allocation8 + $0x8] sm:$0xff]
        %v501 = vld [vmem:[#allocation8 + $0x10] sm:$0xff]
        %v502 = vld [vmem:[#allocation8 + $0x18] sm:$0xff]
        %v503 = vld [vmem:[#allocation8 + $0x20] sm:$0xff]
        %v504 = vld [vmem:[#allocation8 + $0x28] sm:$0xff]
        %v505 = vld [vmem:[#allocation8 + $0x30] sm:$0xff]
        %v506 = vld [vmem:[#allocation8 + $0x38] sm:$0xff]
        %v507 = vld [vmem:[#allocation8 + $0x40] sm:$0xff]
        %v508 = vld [vmem:[#allocation8 + $0x48] sm:$0xff]
        %v509 = vld [vmem:[#allocation8 + $0x50] sm:$0xff]
        %v510 = vld [vmem:[#allocation8 + $0x58] sm:$0xff]
        %v511 = vld [vmem:[#allocation8 + $0x60] sm:$0xff]
        %v512 = vld [vmem:[#allocation8 + $0x68] sm:$0xff]
        %v513 = vld [vmem:[#allocation8 + $0x70] sm:$0xff]
        %v514 = vld [vmem:[#allocation8 + $0x78] sm:$0xff]
        %v515 = vld [vmem:[#allocation8 + $0x80] sm:$0xff]
        %v516 = vld [vmem:[#allocation8 + $0x88] sm:$0xff]
        %v517 = vld [vmem:[#allocation8 + $0x90] sm:$0xff]
        %v518 = vld [vmem:[#allocation8 + $0x98] sm:$0xff]
        %v519 = vld [vmem:[#allocation8 + $0xa0] sm:$0xff]
        %v520 = vld [vmem:[#allocation8 + $0xa8] sm:$0xff]
        %v521 = vld [vmem:[#allocation8 + $0xb0] sm:$0xff]
        %v522 = vld [vmem:[#allocation8 + $0xb8] sm:$0xff]
        %v523 = vld [vmem:[#allocation8 + $0xc0] sm:$0xff]
        %v524 = vld [vmem:[#allocation8 + $0xc8] sm:$0xff]
        %v525 = vld [vmem:[#allocation8 + $0xd0] sm:$0xff]
        %v526 = vld [vmem:[#allocation8 + $0xd8] sm:$0xff]
        %v527 = vld [vmem:[#allocation8 + $0xe0] sm:$0xff]
        %v528 = vld [vmem:[#allocation8 + $0xe8] sm:$0xff]
        %v529 = vld [vmem:[#allocation8 + $0xf0] sm:$0xff]
        %v530 = vld [vmem:[#allocation8 + $0xf8] sm:$0xff]
        %v531 = vld [vmem:[#allocation8 + $0x100] sm:$0xff]
        %v532 = vld [vmem:[#allocation8 + $0x108] sm:$0xff]
        %v533 = vld [vmem:[#allocation8 + $0x110] sm:$0xff]
        %v534 = vld [vmem:[#allocation8 + $0x118] sm:$0xff]
        %v535 = vld [vmem:[#allocation8 + $0x120] sm:$0xff]
        %v536 = vld [vmem:[#allocation8 + $0x128] sm:$0xff]
        %v537 = vld [vmem:[#allocation8 + $0x130] sm:$0xff]
        %v538 = vld [vmem:[#allocation8 + $0x138] sm:$0xff]
        %v539 = vld [vmem:[#allocation8 + $0x140] sm:$0xff]
        %v540 = vld [vmem:[#allocation8 + $0x148] sm:$0xff]
        %v541 = vld [vmem:[#allocation8 + $0x150] sm:$0xff]
        %v542 = vld [vmem:[#allocation8 + $0x158] sm:$0xff]
        %v543 = vld [vmem:[#allocation8 + $0x160] sm:$0xff]
        %v544 = vld [vmem:[#allocation8 + $0x168] sm:$0xff]
        %v545 = vld [vmem:[#allocation8 + $0x170] sm:$0xff]
        %v546 = vld [vmem:[#allocation8 + $0x178] sm:$0xff]
        %v547 = vld [vmem:[%s4] sm:$0x1]
        %v549 = vlaneseq
        %v550 = vshrl.u32 %v549, 7
        %v551 = vsub.s32 0, %v550
        %v552 = vrot.slane %v547, %v551
        %554 = vmatprep.subr.mxu0 0.0
        %555 = vmatpush1.msra.mxu0 %v499
        %556 = vmatprep.subr.mxu0 0.0
        %557 = vmatpush1.msra.mxu0 %v500
        %558 = vmatprep.subr.mxu0 0.0
        %559 = vmatpush1.msra.mxu0 %v501
        %560 = vmatprep.subr.mxu0 0.0
        %561 = vmatpush1.msra.mxu0 %v502
        %562 = vmatprep.subr.mxu0 0.0
        %563 = vmatpush1.msra.mxu0 %v503
        %564 = vmatprep.subr.mxu0 0.0
        %565 = vmatpush1.msra.mxu0 %v504
        %566 = vmatprep.subr.mxu0 0.0
        %567 = vmatpush1.msra.mxu0 %v505
        %568 = vmatprep.subr.mxu0 0.0
        %569 = vmatpush1.msra.mxu0 %v506
        %570 = vmatprep.subr.mxu0 0.0
        %571 = vmatpush1.msra.mxu0 %v507
        %572 = vmatprep.subr.mxu0 0.0
        %573 = vmatpush1.msra.mxu0 %v508
        %574 = vmatprep.subr.mxu0 0.0
        %575 = vmatpush1.msra.mxu0 %v509
        %576 = vmatprep.subr.mxu0 0.0
        %577 = vmatpush1.msra.mxu0 %v510
        %578 = vmatprep.subr.mxu0 0.0
        %579 = vmatpush1.msra.mxu0 %v511
        %580 = vmatprep.subr.mxu0 0.0
        %581 = vmatpush1.msra.mxu0 %v512
        %582 = vmatprep.subr.mxu0 0.0
        %583 = vmatpush1.msra.mxu0 %v513
        %584 = vmatprep.subr.mxu0 0.0
        %585 = vmatpush1.msra.mxu0 %v514
        %586 = vmatprep.subr.mxu0 0.0
        %587 = vmatpush1.msra.mxu0 %v515
        %588 = vmatprep.subr.mxu0 0.0
        %589 = vmatpush1.msra.mxu0 %v516
        %590 = vmatprep.subr.mxu0 0.0
        %591 = vmatpush1.msra.mxu0 %v517
        %592 = vmatprep.subr.mxu0 0.0
        %593 = vmatpush1.msra.mxu0 %v518
        %594 = vmatprep.subr.mxu0 0.0
        %595 = vmatpush1.msra.mxu0 %v519
        %596 = vmatprep.subr.mxu0 0.0
        %597 = vmatpush1.msra.mxu0 %v520
        %598 = vmatprep.subr.mxu0 0.0
        %599 = vmatpush1.msra.mxu0 %v521
        %600 = vmatprep.subr.mxu0 0.0
        %601 = vmatpush1.msra.mxu0 %v522
        %602 = vmatprep.subr.mxu0 0.0
        %603 = vmatpush1.msra.mxu0 %v523
        %604 = vmatprep.subr.mxu0 0.0
        %605 = vmatpush1.msra.mxu0 %v524
        %606 = vmatprep.subr.mxu0 0.0
        %607 = vmatpush1.msra.mxu0 %v525
        %608 = vmatprep.subr.mxu0 0.0
        %609 = vmatpush1.msra.mxu0 %v526
        %610 = vmatprep.subr.mxu0 0.0
        %611 = vmatpush1.msra.mxu0 %v527
        %612 = vmatprep.subr.mxu0 0.0
        %613 = vmatpush1.msra.mxu0 %v528
        %614 = vmatprep.subr.mxu0 0.0
        %615 = vmatpush1.msra.mxu0 %v529
        %616 = vmatprep.subr.mxu0 0.0
        %617 = vmatpush1.msra.mxu0 %v530
        %618 = vmatprep.mubr.f32.mxu0 %v495
        %619 = vmatmul.mubr.f32.gmra.mrb[0].mxu0 %v493
        %v620 = vpop.f32.mrb[0].mxu0
        %v621 = vadd.f32 %v552, %v620
        %v622 = vpop.f32.mrb[0].mxu0
        %623 = vmatprep.mubr.f32.mxu0 %v496
        %624 = vmatmul.mubr.f32.gmra.mrb[0].mxu0 %v494
        %v625 = vpop.f32.mrb[0].mxu0
        %v626 = vadd.f32 %v552, %v625
        %v627 = vpop.f32.mrb[0].mxu0
        %628 = vdwg.mxu0
        %629 = vmatprep.subr.mxu0 0.0
        %630 = vmatpush1.msra.mxu0 %v531
        %631 = vmatprep.subr.mxu0 0.0
        %632 = vmatpush1.msra.mxu0 %v532
        %633 = vmatprep.subr.mxu0 0.0
        %634 = vmatpush1.msra.mxu0 %v533
        %635 = vmatprep.subr.mxu0 0.0
        %636 = vmatpush1.msra.mxu0 %v534
        %637 = vmatprep.subr.mxu0 0.0
        %638 = vmatpush1.msra.mxu0 %v535
        %639 = vmatprep.subr.mxu0 0.0
        %640 = vmatpush1.msra.mxu0 %v536
        %641 = vmatprep.subr.mxu0 0.0
        %642 = vmatpush1.msra.mxu0 %v537
        %643 = vmatprep.subr.mxu0 0.0
        %644 = vmatpush1.msra.mxu0 %v538
        %645 = vmatprep.subr.mxu0 0.0
        %646 = vmatpush1.msra.mxu0 %v539
        %647 = vmatprep.subr.mxu0 0.0
        %648 = vmatpush1.msra.mxu0 %v540
        %649 = vmatprep.subr.mxu0 0.0
        %650 = vmatpush1.msra.mxu0 %v541
        %651 = vmatprep.subr.mxu0 0.0
        %652 = vmatpush1.msra.mxu0 %v542
        %653 = vmatprep.subr.mxu0 0.0
        %654 = vmatpush1.msra.mxu0 %v543
        %655 = vmatprep.subr.mxu0 0.0
        %656 = vmatpush1.msra.mxu0 %v544
        %657 = vmatprep.subr.mxu0 0.0
        %658 = vmatpush1.msra.mxu0 %v545
        %659 = vmatprep.subr.mxu0 0.0
        %660 = vmatpush1.msra.mxu0 %v546
        %661 = vmatprep.subr.mxu0 0.0
        %662 = vmatpush1.msra.mxu0 0.0
        %663 = vmatprep.subr.mxu0 0.0
        %664 = vmatpush1.msra.mxu0 0.0
        %665 = vmatprep.subr.mxu0 0.0
        %666 = vmatpush1.msra.mxu0 0.0
        %667 = vmatprep.subr.mxu0 0.0
        %668 = vmatpush1.msra.mxu0 0.0
        %669 = vmatprep.subr.mxu0 0.0
        %670 = vmatpush1.msra.mxu0 0.0
        %671 = vmatprep.subr.mxu0 0.0
        %672 = vmatpush1.msra.mxu0 0.0
        %673 = vmatprep.subr.mxu0 0.0
        %674 = vmatpush1.msra.mxu0 0.0
        %675 = vmatprep.subr.mxu0 0.0
        %676 = vmatpush1.msra.mxu0 0.0
        %677 = vmatprep.subr.mxu0 0.0
        %678 = vmatpush1.msra.mxu0 0.0
        %679 = vmatprep.subr.mxu0 0.0
        %680 = vmatpush1.msra.mxu0 0.0
        %681 = vmatprep.subr.mxu0 0.0
        %682 = vmatpush1.msra.mxu0 0.0
        %683 = vmatprep.subr.mxu0 0.0
        %684 = vmatpush1.msra.mxu0 0.0
        %685 = vmatprep.subr.mxu0 0.0
        %686 = vmatpush1.msra.mxu0 0.0
        %687 = vmatprep.subr.mxu0 0.0
        %688 = vmatpush1.msra.mxu0 0.0
        %689 = vmatprep.subr.mxu0 0.0
        %690 = vmatpush1.msra.mxu0 0.0
        %691 = vmatprep.subr.mxu0 0.0
        %692 = vmatpush1.msra.mxu0 0.0
        %693 = vmatprep.mubr.f32.mxu0 0.0
        %694 = vmatmul.mubr.f32.gmra.mrb[0].mxu0 %v497
        %v695 = vpop.f32.mrb[0].mxu0
        %v696 = vadd.f32 %v621, %v695
        %v697 = vpop.f32.mrb[0].mxu0
        %698 = vmatprep.mubr.f32.mxu0 0.0
        %699 = vmatmul.mubr.f32.gmra.mrb[0].mxu0 %v498
        %v700 = vpop.f32.mrb[0].mxu0
        %v701 = vadd.f32 %v626, %v700
        %v702 = vpop.f32.mrb[0].mxu0
        %703 = vdwg.mxu0
        %v704 = vadd.f32 %v272, %v696
        %v705 = vadd.f32 %v273, %v701
        %v706 = vmax.f32 %v704, 0.0
        %v707 = vmax.f32 %v705, 0.0
        %708 = vst [vmem:[%s271] sm:$0xff] %v706
        %709 = vst [vmem:[%s271 + $0x8] sm:$0xff] %v707
        %s710 = sand.u32 %s141, 1
        %s711 = scalar_lea.sflag [#allocation5], %s710
        %s712 = sand.u32 %s141, 1
        %s713 = smul.addr %s712, 16
        %s714 = scalar_lea.vmem [#allocation9], %s713
        // Predicated region
        $region53: #{tpu_custom_call.1} parent=39 // pred_check
          %p715 = pneg %p151
        $region54: #{tpu_custom_call.1} parent=39 // pred_check_branch
          %717 = sbr.rel (%p715) target = $region56
        $region55: #{tpu_custom_call.1} parent=39 // pred_region
          %s719 = ssub.s32 256, 256
          %720 = vsyncadd %s711, %s719
          %s721 = smul.addr %s23, 2
          %s722 = smul.addr %s721, 128
          %s723 = scalar_lea.hbm %s5, %s722
          %s724 = sshll.u32 %s714, 4
          %s725 = int_to_ptr.vmem [resolvable:$true] %s724
          %730 = dma.vmem_to_hbm [thread:$0]  %s725, 256, %s723, %s711, 128, 128, 8
        $region56: #{tpu_custom_call.1} parent=39 // pred_fallthru
          _
      $region40: #{tpu_custom_call.1} parent=5 // pred_fallthru
        _
      %p731 = scmp.le.s32.totalorder 2, %s18
      // Predicated region
      $region57: #{tpu_custom_call.1} parent=5 // pred_check
        %p732 = pneg %p731
      $region58: #{tpu_custom_call.1} parent=5 // pred_check_branch
        %734 = sbr.rel (%p732) target = $region60
      $region59: #{tpu_custom_call.1} parent=5 // pred_region
        %s735 = ssub.s32 %s18, 2
        // Predicated region
        $region61: #{tpu_custom_call.1} parent=59 // pred_check
          %p736 = pneg %p157
        $region62: #{tpu_custom_call.1} parent=59 // pred_check_branch
          %738 = sbr.rel (%p736) target = $region64
        $region63: #{tpu_custom_call.1} parent=59 // pred_region
          %s739 = sand.u32 %s142, 1
          %s740 = scalar_lea.sflag [#allocation5], %s739
          %s741 = sand.u32 %s142, 1
          %s742 = smul.addr %s741, 16
          %s743 = scalar_lea.vmem [#allocation9], %s742
          %744 = dma.done %s740, 256
        $region64: #{tpu_custom_call.1} parent=59 // pred_fallthru
          _
      $region60: #{tpu_custom_call.1} parent=5 // pred_fallthru
        _
    $region6: #{tpu_custom_call.1} parent=1 // loop_footer
      %s22 = sadd.s32 1, %s18
    $region7: #{tpu_custom_call.1} parent=1 // loop_footer_branch
      %17 = sbr.rel target = $region3
    $region8: #{tpu_custom_call.1} parent=1 // loop_exit
      _
    %745 = vsyncpa [#allocation4], 1
    %s746 = scalar_lea.sflag [#allocation4], 1
    %747 = vsyncpa %s746, 1
    %748 = vsyncpa [#allocation7], 1
    %749 = vsyncpa [#allocation5], 1
    %s750 = scalar_lea.sflag [#allocation5], 1
    %751 = vsyncpa %s750, 1

</llo_original>
